<compile_context>
chip_gen: v6e
topology: v6e:2x2x1
jax: 0.10.0
libtpu: 0.0.40
codegen_flags: <defaults>
</compile_context>

<pallas_src>
import functools
import math

import jax
import jax.numpy as jnp
from jax import lax
from jax.experimental import pallas as pl
from jax.experimental.pallas import tpu as pltpu


def _pick_block(n, preferred, quantum):
    """Largest multiple of `quantum` that divides n and is <= preferred (else n)."""
    if n <= preferred:
        return n
    b = (preferred // quantum) * quantum
    while b >= quantum:
        if n % b == 0:
            return b
        b -= quantum
    return n


def _attn_kernel(x_ref, wq_ref, wk_ref, wv_ref, bq_ref, bk_ref, bv_ref,
                 ot_ref, q_sc, m_sc, l_sc, acc_sc,
                 *, tq, tk, causal, compute_dtype):
    # x_ref: (1, S, D)   weights: (D, D)   biases: (1, D)   ot_ref: (1, D, tq)
    qi = pl.program_id(1)
    kv = pl.program_id(2)
    nk = pl.num_programs(2)
    D = wq_ref.shape[0]
    cd = compute_dtype

    @pl.when(kv == 0)
    def _init():
        # q for this q-block, with the 1/sqrt(d_head) scale already folded
        # into wq/bq on the host.
        q_start = pl.multiple_of(qi * tq, tq)
        xq = x_ref[0, pl.ds(q_start, tq), :]
        q_sc[...] = (jnp.dot(xq.astype(cd), wq_ref[...].astype(cd),
                             preferred_element_type=jnp.float32)
                     + bq_ref[...])
        m_sc[...] = jnp.full((tq, 1), -jnp.inf, jnp.float32)
        l_sc[...] = jnp.zeros((tq, 1), jnp.float32)
        acc_sc[...] = jnp.zeros((tq, D), jnp.float32)

    def _update():
        kv_start = pl.multiple_of(kv * tk, tk)
        xkv = x_ref[0, pl.ds(kv_start, tk), :]
        k_blk = (jnp.dot(xkv.astype(cd), wk_ref[...].astype(cd),
                         preferred_element_type=jnp.float32) + bk_ref[...])
        v_blk = (jnp.dot(xkv.astype(cd), wv_ref[...].astype(cd),
                         preferred_element_type=jnp.float32) + bv_ref[...])

        # scores (tq, tk) = q @ k^T  (NT contraction, native MXU pattern).
        s = lax.dot_general(q_sc[...].astype(cd), k_blk.astype(cd),
                            (((1,), (1,)), ((), ())),
                            preferred_element_type=jnp.float32)
        if causal:
            row = qi * tq + lax.broadcasted_iota(jnp.int32, (tq, tk), 0)
            col = kv * tk + lax.broadcasted_iota(jnp.int32, (tq, tk), 1)
            s = jnp.where(col > row, -jnp.inf, s)

        # Online softmax (unnormalized accumulation; normalization deferred).
        m_new = jnp.maximum(m_sc[...], jnp.max(s, axis=-1, keepdims=True))
        alpha = jnp.exp(m_sc[...] - m_new)
        p = jnp.exp(s - m_new)
        l_sc[...] = alpha * l_sc[...] + jnp.sum(p, axis=-1, keepdims=True)
        acc_sc[...] = alpha * acc_sc[...] + jnp.dot(
            p.astype(cd), v_blk.astype(cd), preferred_element_type=jnp.float32)
        m_sc[...] = m_new

    if causal:
        # Skip kv blocks that lie entirely above the causal diagonal.
        pl.when(kv * tk <= qi * tq + (tq - 1))(_update)
    else:
        _update()

    @pl.when(kv == nk - 1)
    def _finalize():
        # Deferred normalization: one reciprocal per row, then a (tq, D) scale.
        o = acc_sc[...] * (1.0 / l_sc[...])                       # (tq, D)
        # Transpose (tq, D) -> (D, tq) on the MXU with an identity matmul
        # (exact permutation; avoids unsupported lane-changing reshapes).
        eye = (lax.broadcasted_iota(jnp.int32, (D, D), 0)
               == lax.broadcasted_iota(jnp.int32, (D, D), 1)
               ).astype(jnp.float32)
        o_t = lax.dot_general(eye, o, (((1,), (1,)), ((), ())),
                              preferred_element_type=jnp.float32)  # (D, tq)
        ot_ref[0] = o_t.astype(ot_ref.dtype)


def _proj_kernel(y_ref, wo_ref, bo_ref, o_ref, *, compute_dtype):
    # y_ref: (rb, D)  wo_ref: (D, D)  bo_ref: (1, D)  o_ref: (rb, D)
    cd = compute_dtype
    o_ref[...] = (jnp.dot(y_ref[...].astype(cd), wo_ref[...].astype(cd),
                          preferred_element_type=jnp.float32)
                  + bo_ref[...]).astype(o_ref.dtype)


def self_attention(x, wqkv_t, bqkv, wo_t, bo, *, n_heads, causal_mask=True,
                   block_q=256, block_kv=512, block_rows=512,
                   compute_dtype=jnp.float32):
    """x: (B, S, D) f32.  wqkv_t: (D, 3D), bqkv: (3D,), wo_t: (D, D), bo: (D,).

    Weights are pre-transposed to (in, out) so kernels compute y = x @ W + b.
    Set compute_dtype=jnp.bfloat16 on v5e/v6e/v7x for full MXU throughput
    (f32 accumulation is kept either way).
    """
    B, S, D = x.shape
    d_head = D // n_heads
    scale = 1.0 / math.sqrt(d_head)

    # Lane-aligned split of the fused QKV weight into three (D, D) operands;
    # fold the softmax scale into the q projection (masked entries stay -inf,
    # so this is equivalent to the reference's post-mask scaling).
    wq_t = wqkv_t[:, 0 * D:1 * D] * scale
    wk_t = wqkv_t[:, 1 * D:2 * D]
    wv_t = wqkv_t[:, 2 * D:3 * D]
    bq = (bqkv[0 * D:1 * D] * scale).reshape(1, D)
    bk = bqkv[1 * D:2 * D].reshape(1, D)
    bv = bqkv[2 * D:3 * D].reshape(1, D)

    # q blocks become the last (lane) dim of the transposed output, so they must
    # be 128-aligned unless they span the whole sequence; kv blocks only need
    # sublane (8) alignment for the in-kernel dynamic slice.
    tq = _pick_block(S, block_q, 128)
    tk = _pick_block(S, block_kv, 8)
    nq = S // tq
    nk = S // tk

    attn_t = pl.pallas_call(
        functools.partial(_attn_kernel, tq=tq, tk=tk,
                          causal=bool(causal_mask), compute_dtype=compute_dtype),
        out_shape=jax.ShapeDtypeStruct((B, D, S), jnp.float32),
        grid_spec=pltpu.PrefetchScalarGridSpec(
            num_scalar_prefetch=0,
            grid=(B, nq, nk),
            in_specs=[
                pl.BlockSpec((1, S, D), lambda b, i, j: (b, 0, 0)),  # x (resident/batch)
                pl.BlockSpec((D, D), lambda b, i, j: (0, 0)),        # wq (resident)
                pl.BlockSpec((D, D), lambda b, i, j: (0, 0)),        # wk
                pl.BlockSpec((D, D), lambda b, i, j: (0, 0)),        # wv
                pl.BlockSpec((1, D), lambda b, i, j: (0, 0)),        # bq
                pl.BlockSpec((1, D), lambda b, i, j: (0, 0)),        # bk
                pl.BlockSpec((1, D), lambda b, i, j: (0, 0)),        # bv
            ],
            out_specs=pl.BlockSpec((1, D, tq), lambda b, i, j: (b, 0, i)),
            scratch_shapes=[
                pltpu.VMEM((tq, D), jnp.float32),   # q block (pre-scaled)
                pltpu.VMEM((tq, 1), jnp.float32),   # running max
                pltpu.VMEM((tq, 1), jnp.float32),   # running sum
                pltpu.VMEM((tq, D), jnp.float32),   # output accumulator
            ]),
        compiler_params=pltpu.CompilerParams(
            dimension_semantics=("parallel", "parallel", "arbitrary"),
            # Above the 32 MiB default, below v7x's 64 MiB physical VMEM.
            vmem_limit_bytes=48 * 1024 * 1024),
    )(x, wq_t, wk_t, wv_t, bq, bk, bv)

    # Reference scramble `outputs.transpose(1, 2).reshape((b, pixels, d_embed))`:
    # attn_t already holds outputs^T per batch, so the scramble is a zero-copy
    # row-major reshape (no XLA transpose pass), flattened to rows for the
    # lane-dense projection.
    # TODO(synk): fusing this scramble + W_o into the attention kernel needs an
    # in-kernel lane-changing reshape of the (D, S) tile, which Mosaic does not
    # reliably support; kept as a free reshape + a second projection kernel.
    y = attn_t.reshape(B * S, D)

    rows = B * S
    rb = _pick_block(rows, block_rows, 8)

    out = pl.pallas_call(
        functools.partial(_proj_kernel, compute_dtype=compute_dtype),
        out_shape=jax.ShapeDtypeStruct((rows, D), jnp.float32),
        grid_spec=pltpu.PrefetchScalarGridSpec(
            num_scalar_prefetch=0,
            grid=(rows // rb,),
            in_specs=[
                pl.BlockSpec((rb, D), lambda r: (r, 0)),
                pl.BlockSpec((D, D), lambda r: (0, 0)),
                pl.BlockSpec((1, D), lambda r: (0, 0)),
            ],
            out_specs=pl.BlockSpec((rb, D), lambda r: (r, 0))),
        compiler_params=pltpu.CompilerParams(
            dimension_semantics=("parallel",),
            vmem_limit_bytes=48 * 1024 * 1024),
    )(y, wo_t, bo.reshape(1, D))

    return out.reshape(B, S, D)


if __name__ == "__main__":
    # Small shapes consistent with the module: batch=2, pixels(seq)=8, d_embed=32, heads=4.
    B, S, D = 2, 8, 32
    n_heads = 4

    key = jax.random.PRNGKey(0)
    k_x, k_wqkv, k_bqkv, k_wo, k_bo = jax.random.split(key, 5)

    x = jax.random.normal(k_x, (B, S, D), dtype=jnp.float32)

    # PyTorch Linear-shaped params: W_qkv (3D, D), W_o (D, D), default-style init.
    bound = 1.0 / math.sqrt(D)
    wqkv = jax.random.uniform(k_wqkv, (3 * D, D), jnp.float32, -bound, bound)
    bqkv = jax.random.uniform(k_bqkv, (3 * D,), jnp.float32, -bound, bound)
    wo = jax.random.uniform(k_wo, (D, D), jnp.float32, -bound, bound)
    bo = jax.random.uniform(k_bo, (D,), jnp.float32, -bound, bound)

    # Pass weights pre-transposed to (in, out).
    out = self_attention(x, wqkv.T, bqkv, wo.T, bo,
                         n_heads=n_heads, causal_mask=True)
    out = jax.block_until_ready(out)

    # Pure-JAX reference reproducing the PyTorch forward exactly.
    qkv = x @ wqkv.T + bqkv
    q, k, v = jnp.split(qkv, 3, axis=-1)
    w = q @ jnp.swapaxes(k, -1, -2)
    mask = jnp.triu(jnp.ones((S, S), dtype=bool), 1)
    w = jnp.where(mask[None], -jnp.inf, w)
    w = w / math.sqrt(D // n_heads)
    w = jax.nn.softmax(w, axis=-1)
    o = w @ v
    o = jnp.swapaxes(o, 1, 2).reshape(B, S, D)
    ref = o @ wo.T + bo

    err = jnp.max(jnp.abs(out - ref))
    assert jnp.allclose(out, ref, atol=2e-4, rtol=2e-4), f"max abs err {err}"
    print("KERNEL_OK")
</pallas_src>

<mosaic_0001>
module attributes {stable_mosaic.version = 11 : i64} {
  func.func @_attn_kernel(%arg0: i32, %arg1: i32, %arg2: i32, %arg3: memref<1x8x32xf32, #tpu.memory_space<vmem>>, %arg4: memref<32x32xf32, #tpu.memory_space<vmem>>, %arg5: memref<32x32xf32, #tpu.memory_space<vmem>>, %arg6: memref<32x32xf32, #tpu.memory_space<vmem>>, %arg7: memref<1x32xf32, #tpu.memory_space<vmem>>, %arg8: memref<1x32xf32, #tpu.memory_space<vmem>>, %arg9: memref<1x32xf32, #tpu.memory_space<vmem>>, %arg10: memref<1x32x8xf32, #tpu.memory_space<vmem>>, %arg11: memref<8x32xf32, #tpu.memory_space<vmem>>, %arg12: memref<8x1xf32, #tpu.memory_space<vmem>>, %arg13: memref<8x1xf32, #tpu.memory_space<vmem>>, %arg14: memref<8x32xf32, #tpu.memory_space<vmem>>) attributes {dimension_semantics = [#tpu.dimension_semantics<parallel>, #tpu.dimension_semantics<parallel>, #tpu.dimension_semantics<arbitrary>], iteration_bounds = array<i64: 2, 1, 1>, scalar_prefetch = 0 : i64, scratch_operands = 4 : i64, tpu.core_type = #tpu.core_type<tc>, window_params = [{transform_indices = @transform_0, window_bounds = array<i64: 1, 8, 32>}, {pipeline_mode = #tpu.pipeline_mode<synchronous>, transform_indices = @transform_1, window_bounds = array<i64: 32, 32>}, {pipeline_mode = #tpu.pipeline_mode<synchronous>, transform_indices = @transform_2, window_bounds = array<i64: 32, 32>}, {pipeline_mode = #tpu.pipeline_mode<synchronous>, transform_indices = @transform_3, window_bounds = array<i64: 32, 32>}, {pipeline_mode = #tpu.pipeline_mode<synchronous>, transform_indices = @transform_4, window_bounds = array<i64: 1, 32>}, {pipeline_mode = #tpu.pipeline_mode<synchronous>, transform_indices = @transform_5, window_bounds = array<i64: 1, 32>}, {pipeline_mode = #tpu.pipeline_mode<synchronous>, transform_indices = @transform_6, window_bounds = array<i64: 1, 32>}, {transform_indices = @transform_7, window_bounds = array<i64: 1, 32, 8>}]} {
    %c0_i32 = arith.constant 0 : i32
    %0 = arith.cmpi eq, %arg2, %c0_i32 : i32
    %1 = arith.extui %0 : i1 to i32
    %c0_i32_0 = arith.constant 0 : i32
    %2 = arith.cmpi ne, %1, %c0_i32_0 : i32
    scf.if %2 {
      %c8_i32_5 = arith.constant 8 : i32
      %12 = arith.muli %arg1, %c8_i32_5 : i32
      %13 = tpu.assume_multiple %12, 8 : i32
      %c0 = arith.constant 0 : index
      %14 = arith.index_cast %13 : i32 to index
      %c0_6 = arith.constant 0 : index
      %15 = vector.load %arg3[%c0, %14, %c0_6] : memref<1x8x32xf32, #tpu.memory_space<vmem>>, vector<1x8x32xf32>
      %16 = vector.shape_cast %15 : vector<1x8x32xf32> to vector<8x32xf32>
      %c0_7 = arith.constant 0 : index
      %c0_8 = arith.constant 0 : index
      %17 = vector.load %arg4[%c0_7, %c0_8] : memref<32x32xf32, #tpu.memory_space<vmem>>, vector<32x32xf32>
      %cst = arith.constant dense<0.000000e+00> : vector<8x32xf32>
      %18 = tpu.matmul %16, %17, %cst {dimension_numbers = #tpu.dot_dimension_numbers<[1], [0], [0], [1], [0, 0, 1, 1], [], []>} : vector<8x32xf32>, vector<32x32xf32>, vector<8x32xf32> -> vector<8x32xf32>
      %c0_9 = arith.constant 0 : index
      %c0_10 = arith.constant 0 : index
      %19 = vector.load %arg7[%c0_9, %c0_10] : memref<1x32xf32, #tpu.memory_space<vmem>>, vector<1x32xf32>
      %20 = vector.broadcast %19 : vector<1x32xf32> to vector<8x32xf32>
      %21 = arith.addf %18, %20 : vector<8x32xf32>
      %c0_11 = arith.constant 0 : index
      %c0_12 = arith.constant 0 : index
      %22 = vector.load %arg11[%c0_11, %c0_12] : memref<8x32xf32, #tpu.memory_space<vmem>>, vector<8x32xf32>
      tpu.vector_store %arg11[%c0_11, %c0_12], %21 {strides = array<i32>} : memref<8x32xf32, #tpu.memory_space<vmem>>, vector<8x32xf32>,
      %cst_13 = arith.constant 0xFF800000 : f32
      %23 = vector.broadcast %cst_13 : f32 to vector<8x1xf32>
      %c0_14 = arith.constant 0 : index
      %c0_15 = arith.constant 0 : index
      %24 = vector.load %arg12[%c0_14, %c0_15] : memref<8x1xf32, #tpu.memory_space<vmem>>, vector<8x1xf32>
      tpu.vector_store %arg12[%c0_14, %c0_15], %23 {strides = array<i32>} : memref<8x1xf32, #tpu.memory_space<vmem>>, vector<8x1xf32>,
      %cst_16 = arith.constant 0.000000e+00 : f32
      %25 = vector.broadcast %cst_16 : f32 to vector<8x1xf32>
      %c0_17 = arith.constant 0 : index
      %c0_18 = arith.constant 0 : index
      %26 = vector.load %arg13[%c0_17, %c0_18] : memref<8x1xf32, #tpu.memory_space<vmem>>, vector<8x1xf32>
      tpu.vector_store %arg13[%c0_17, %c0_18], %25 {strides = array<i32>} : memref<8x1xf32, #tpu.memory_space<vmem>>, vector<8x1xf32>,
      %cst_19 = arith.constant 0.000000e+00 : f32
      %27 = vector.broadcast %cst_19 : f32 to vector<8x32xf32>
      %c0_20 = arith.constant 0 : index
      %c0_21 = arith.constant 0 : index
      %28 = vector.load %arg14[%c0_20, %c0_21] : memref<8x32xf32, #tpu.memory_space<vmem>>, vector<8x32xf32>
      tpu.vector_store %arg14[%c0_20, %c0_21], %27 {strides = array<i32>} : memref<8x32xf32, #tpu.memory_space<vmem>>, vector<8x32xf32>,
    } else {
    }
    %c8_i32 = arith.constant 8 : i32
    %3 = arith.muli %arg2, %c8_i32 : i32
    %c8_i32_1 = arith.constant 8 : i32
    %4 = arith.muli %arg1, %c8_i32_1 : i32
    %c7_i32 = arith.constant 7 : i32
    %5 = arith.addi %4, %c7_i32 : i32
    %6 = arith.cmpi sle, %3, %5 : i32
    %7 = arith.extui %6 : i1 to i32
    %c0_i32_2 = arith.constant 0 : i32
    %8 = arith.cmpi ne, %7, %c0_i32_2 : i32
    scf.if %8 {
      %c8_i32_5 = arith.constant 8 : i32
      %12 = arith.muli %arg2, %c8_i32_5 : i32
      %13 = tpu.assume_multiple %12, 8 : i32
      %c0 = arith.constant 0 : index
      %14 = arith.index_cast %13 : i32 to index
      %c0_6 = arith.constant 0 : index
      %15 = vector.load %arg3[%c0, %14, %c0_6] : memref<1x8x32xf32, #tpu.memory_space<vmem>>, vector<1x8x32xf32>
      %16 = vector.shape_cast %15 : vector<1x8x32xf32> to vector<8x32xf32>
      %c0_7 = arith.constant 0 : index
      %c0_8 = arith.constant 0 : index
      %17 = vector.load %arg5[%c0_7, %c0_8] : memref<32x32xf32, #tpu.memory_space<vmem>>, vector<32x32xf32>
      %cst = arith.constant dense<0.000000e+00> : vector<8x32xf32>
      %18 = tpu.matmul %16, %17, %cst {dimension_numbers = #tpu.dot_dimension_numbers<[1], [0], [0], [1], [0, 0, 1, 1], [], []>} : vector<8x32xf32>, vector<32x32xf32>, vector<8x32xf32> -> vector<8x32xf32>
      %c0_9 = arith.constant 0 : index
      %c0_10 = arith.constant 0 : index
      %19 = vector.load %arg8[%c0_9, %c0_10] : memref<1x32xf32, #tpu.memory_space<vmem>>, vector<1x32xf32>
      %20 = vector.broadcast %19 : vector<1x32xf32> to vector<8x32xf32>
      %21 = arith.addf %18, %20 : vector<8x32xf32>
      %c0_11 = arith.constant 0 : index
      %c0_12 = arith.constant 0 : index
      %22 = vector.load %arg6[%c0_11, %c0_12] : memref<32x32xf32, #tpu.memory_space<vmem>>, vector<32x32xf32>
      %cst_13 = arith.constant dense<0.000000e+00> : vector<8x32xf32>
      %23 = tpu.matmul %16, %22, %cst_13 {dimension_numbers = #tpu.dot_dimension_numbers<[1], [0], [0], [1], [0, 0, 1, 1], [], []>} : vector<8x32xf32>, vector<32x32xf32>, vector<8x32xf32> -> vector<8x32xf32>
      %c0_14 = arith.constant 0 : index
      %c0_15 = arith.constant 0 : index
      %24 = vector.load %arg9[%c0_14, %c0_15] : memref<1x32xf32, #tpu.memory_space<vmem>>, vector<1x32xf32>
      %25 = vector.broadcast %24 : vector<1x32xf32> to vector<8x32xf32>
      %26 = arith.addf %23, %25 : vector<8x32xf32>
      %c0_16 = arith.constant 0 : index
      %c0_17 = arith.constant 0 : index
      %27 = vector.load %arg11[%c0_16, %c0_17] : memref<8x32xf32, #tpu.memory_space<vmem>>, vector<8x32xf32>
      %cst_18 = arith.constant dense<0.000000e+00> : vector<8x8xf32>
      %28 = tpu.matmul %27, %21, %cst_18 {dimension_numbers = #tpu.dot_dimension_numbers<[1], [1], [0], [0], [0, 0, 1, 0], [], []>} : vector<8x32xf32>, vector<8x32xf32>, vector<8x8xf32> -> vector<8x8xf32>
      %c8_i32_19 = arith.constant 8 : i32
      %29 = arith.muli %arg1, %c8_i32_19 : i32
      %30 = tpu.iota {dimensions = array<i32: 0>} : vector<8x8xi32>
      %31 = vector.broadcast %29 : i32 to vector<8x8xi32>
      %32 = arith.addi %31, %30 : vector<8x8xi32>
      %c8_i32_20 = arith.constant 8 : i32
      %33 = arith.muli %arg2, %c8_i32_20 : i32
      %34 = tpu.iota {dimensions = array<i32: 1>} : vector<8x8xi32>
      %35 = vector.broadcast %33 : i32 to vector<8x8xi32>
      %36 = arith.addi %35, %34 : vector<8x8xi32>
      %37 = arith.cmpi sgt, %36, %32 : vector<8x8xi32>
      %cst_21 = arith.constant 0xFF800000 : f32
      %38 = vector.broadcast %cst_21 : f32 to vector<8x8xf32>
      %39 = arith.select %37, %38, %28 : vector<8x8xi1>, vector<8x8xf32>
      %c0_22 = arith.constant 0 : index
      %c0_23 = arith.constant 0 : index
      %40 = vector.load %arg12[%c0_22, %c0_23] : memref<8x1xf32, #tpu.memory_space<vmem>>, vector<8x1xf32>
      %cst_24 = arith.constant dense<0xFF800000> : vector<8xf32>
      %41 = vector.multi_reduction <maximumf>, %39, %cst_24 [1] : vector<8x8xf32> to vector<8xf32>
      %42 = vector.shape_cast %41 : vector<8xf32> to vector<8x1xf32>
      %43 = arith.maximumf %40, %42 : vector<8x1xf32>
      %c0_25 = arith.constant 0 : index
      %c0_26 = arith.constant 0 : index
      %44 = vector.load %arg12[%c0_25, %c0_26] : memref<8x1xf32, #tpu.memory_space<vmem>>, vector<8x1xf32>
      %45 = arith.subf %44, %43 : vector<8x1xf32>
      %46 = math.exp %45 : vector<8x1xf32>
      %47 = vector.broadcast %43 : vector<8x1xf32> to vector<8x8xf32>
      %48 = arith.subf %39, %47 : vector<8x8xf32>
      %49 = math.exp %48 : vector<8x8xf32>
      %c0_27 = arith.constant 0 : index
      %c0_28 = arith.constant 0 : index
      %50 = vector.load %arg13[%c0_27, %c0_28] : memref<8x1xf32, #tpu.memory_space<vmem>>, vector<8x1xf32>
      %51 = arith.mulf %46, %50 : vector<8x1xf32>
      %cst_29 = arith.constant dense<0.000000e+00> : vector<8xf32>
      %52 = vector.multi_reduction <add>, %49, %cst_29 [1] : vector<8x8xf32> to vector<8xf32>
      %53 = vector.shape_cast %52 : vector<8xf32> to vector<8x1xf32>
      %54 = arith.addf %51, %53 : vector<8x1xf32>
      %c0_30 = arith.constant 0 : index
      %c0_31 = arith.constant 0 : index
      %55 = vector.load %arg13[%c0_30, %c0_31] : memref<8x1xf32, #tpu.memory_space<vmem>>, vector<8x1xf32>
      tpu.vector_store %arg13[%c0_30, %c0_31], %54 {strides = array<i32>} : memref<8x1xf32, #tpu.memory_space<vmem>>, vector<8x1xf32>,
      %c0_32 = arith.constant 0 : index
      %c0_33 = arith.constant 0 : index
      %56 = vector.load %arg14[%c0_32, %c0_33] : memref<8x32xf32, #tpu.memory_space<vmem>>, vector<8x32xf32>
      %57 = vector.broadcast %46 : vector<8x1xf32> to vector<8x32xf32>
      %58 = arith.mulf %57, %56 : vector<8x32xf32>
      %cst_34 = arith.constant dense<0.000000e+00> : vector<8x32xf32>
      %59 = tpu.matmul %49, %26, %cst_34 {dimension_numbers = #tpu.dot_dimension_numbers<[1], [0], [0], [1], [0, 0, 1, 1], [], []>} : vector<8x8xf32>, vector<8x32xf32>, vector<8x32xf32> -> vector<8x32xf32>
      %60 = arith.addf %58, %59 : vector<8x32xf32>
      %c0_35 = arith.constant 0 : index
      %c0_36 = arith.constant 0 : index
      %61 = vector.load %arg14[%c0_35, %c0_36] : memref<8x32xf32, #tpu.memory_space<vmem>>, vector<8x32xf32>
      tpu.vector_store %arg14[%c0_35, %c0_36], %60 {strides = array<i32>} : memref<8x32xf32, #tpu.memory_space<vmem>>, vector<8x32xf32>,
      %c0_37 = arith.constant 0 : index
      %c0_38 = arith.constant 0 : index
      %62 = vector.load %arg12[%c0_37, %c0_38] : memref<8x1xf32, #tpu.memory_space<vmem>>, vector<8x1xf32>
      tpu.vector_store %arg12[%c0_37, %c0_38], %43 {strides = array<i32>} : memref<8x1xf32, #tpu.memory_space<vmem>>, vector<8x1xf32>,
    } else {
    }
    %c0_i32_3 = arith.constant 0 : i32
    %9 = arith.cmpi eq, %arg2, %c0_i32_3 : i32
    %10 = arith.extui %9 : i1 to i32
    %c0_i32_4 = arith.constant 0 : i32
    %11 = arith.cmpi ne, %10, %c0_i32_4 : i32
    scf.if %11 {
      %c0 = arith.constant 0 : index
      %c0_5 = arith.constant 0 : index
      %12 = vector.load %arg14[%c0, %c0_5] : memref<8x32xf32, #tpu.memory_space<vmem>>, vector<8x32xf32>
      %c0_6 = arith.constant 0 : index
      %c0_7 = arith.constant 0 : index
      %13 = vector.load %arg13[%c0_6, %c0_7] : memref<8x1xf32, #tpu.memory_space<vmem>>, vector<8x1xf32>
      %cst = arith.constant 1.000000e+00 : f32
      %14 = vector.broadcast %cst : f32 to vector<8x1xf32>
      %15 = arith.divf %14, %13 : vector<8x1xf32>
      %16 = vector.broadcast %15 : vector<8x1xf32> to vector<8x32xf32>
      %17 = arith.mulf %12, %16 : vector<8x32xf32>
      %18 = tpu.iota {dimensions = array<i32: 0>} : vector<32x32xi32>
      %19 = tpu.iota {dimensions = array<i32: 1>} : vector<32x32xi32>
      %20 = arith.cmpi eq, %18, %19 : vector<32x32xi32>
      %21 = arith.extui %20 : vector<32x32xi1> to vector<32x32xi32>
      %22 = arith.sitofp %21 : vector<32x32xi32> to vector<32x32xf32>
      %cst_8 = arith.constant dense<0.000000e+00> : vector<32x8xf32>
      %23 = tpu.matmul %22, %17, %cst_8 {dimension_numbers = #tpu.dot_dimension_numbers<[1], [1], [0], [0], [0, 0, 1, 0], [], []>} : vector<32x32xf32>, vector<8x32xf32>, vector<32x8xf32> -> vector<32x8xf32>
      %c0_9 = arith.constant 0 : index
      %c0_10 = arith.constant 0 : index
      %c0_11 = arith.constant 0 : index
      %24 = vector.load %arg10[%c0_9, %c0_10, %c0_11] : memref<1x32x8xf32, #tpu.memory_space<vmem>>, vector<1x32x8xf32>
      %25 = vector.shape_cast %24 : vector<1x32x8xf32> to vector<32x8xf32>
      %26 = vector.shape_cast %23 : vector<32x8xf32> to vector<1x32x8xf32>
      tpu.vector_store %arg10[%c0_9, %c0_10, %c0_11], %26 {strides = array<i32>} : memref<1x32x8xf32, #tpu.memory_space<vmem>>, vector<1x32x8xf32>,
    } else {
    }
    return
  }
  func.func @transform_0(%arg0: i32, %arg1: i32, %arg2: i32) -> (i32, i32, i32) {
    %c0_i32 = arith.constant 0 : i32
    %c0_i32_0 = arith.constant 0 : i32
    %c0_i32_1 = arith.constant 0 : i32
    return %arg0, %c0_i32, %c0_i32_0 : i32, i32, i32
  }
  func.func @transform_1(%arg0: i32, %arg1: i32, %arg2: i32) -> (i32, i32) {
    %c0_i32 = arith.constant 0 : i32
    %c0_i32_0 = arith.constant 0 : i32
    %c0_i32_1 = arith.constant 0 : i32
    return %c0_i32, %c0_i32_0 : i32, i32
  }
  func.func @transform_2(%arg0: i32, %arg1: i32, %arg2: i32) -> (i32, i32) {
    %c0_i32 = arith.constant 0 : i32
    %c0_i32_0 = arith.constant 0 : i32
    %c0_i32_1 = arith.constant 0 : i32
    return %c0_i32, %c0_i32_0 : i32, i32
  }
  func.func @transform_3(%arg0: i32, %arg1: i32, %arg2: i32) -> (i32, i32) {
    %c0_i32 = arith.constant 0 : i32
    %c0_i32_0 = arith.constant 0 : i32
    %c0_i32_1 = arith.constant 0 : i32
    return %c0_i32, %c0_i32_0 : i32, i32
  }
  func.func @transform_4(%arg0: i32, %arg1: i32, %arg2: i32) -> (i32, i32) {
    %c0_i32 = arith.constant 0 : i32
    %c0_i32_0 = arith.constant 0 : i32
    %c0_i32_1 = arith.constant 0 : i32
    return %c0_i32, %c0_i32_0 : i32, i32
  }
  func.func @transform_5(%arg0: i32, %arg1: i32, %arg2: i32) -> (i32, i32) {
    %c0_i32 = arith.constant 0 : i32
    %c0_i32_0 = arith.constant 0 : i32
    %c0_i32_1 = arith.constant 0 : i32
    return %c0_i32, %c0_i32_0 : i32, i32
  }
  func.func @transform_6(%arg0: i32, %arg1: i32, %arg2: i32) -> (i32, i32) {
    %c0_i32 = arith.constant 0 : i32
    %c0_i32_0 = arith.constant 0 : i32
    %c0_i32_1 = arith.constant 0 : i32
    return %c0_i32, %c0_i32_0 : i32, i32
  }
  func.func @transform_7(%arg0: i32, %arg1: i32, %arg2: i32) -> (i32, i32, i32) {
    %c0_i32 = arith.constant 0 : i32
    %c0_i32_0 = arith.constant 0 : i32
    return %arg0, %c0_i32, %arg1 : i32, i32, i32
  }
}

</mosaic_0001>

<llo_original>
// kernel: tpu_custom_call.1
$region0: #{tpu_custom_call.1}
  #allocation0 [shape = 'u32[]', space=smem, size = 0x4, offset = 0x4, fixed_abs, tag = 'smem constant byte address 0x4 - core index']
  #allocation1 [shape = 'u32[144,128]{1,0:T(1,128)}', space=vmem, size = 0x12000, scoped, tag = 'internal scratch']
  #allocation2 [shape = 'f32[8,32]{1,0:T(8,128)}', space=vmem, size = 0x1000, scoped, tag = 'scratch operand']
  #allocation3 [shape = 'f32[8,1]{1,0:T(8,128)}', space=vmem, size = 0x1000, scoped, tag = 'scratch operand']
  #allocation4 [shape = 'f32[8,1]{1,0:T(8,128)}', space=vmem, size = 0x1000, scoped, tag = 'scratch operand']
  #allocation5 [shape = 'f32[8,32]{1,0:T(8,128)}', space=vmem, size = 0x1000, scoped, tag = 'scratch operand']
  %s0 = inlined_call_operand.hbm [shape: f32[2,8,32], index: 0, kind: input, shape index: {}]
  %s1 = inlined_call_operand.hbm [shape: f32[32,32], index: 1, kind: input, shape index: {}]
  %s2 = inlined_call_operand.hbm [shape: f32[32,32], index: 2, kind: input, shape index: {}]
  %s3 = inlined_call_operand.hbm [shape: f32[32,32], index: 3, kind: input, shape index: {}]
  %s4 = inlined_call_operand.vmem [shape: f32[1,32], index: 4, kind: input, shape index: {}]
  %s5 = inlined_call_operand.vmem [shape: f32[1,32], index: 5, kind: input, shape index: {}]
  %s6 = inlined_call_operand.vmem [shape: f32[1,32], index: 6, kind: input, shape index: {}]
  %s7 = inlined_call_operand.vmem [shape: f32[2,32,8], index: 7, kind: output, shape index: {}]
  %s8 = sld [smem:[#allocation0]]
  $region89: #{tpu_custom_call.1} parent=0
    _
  %s10 = ssub.s32 1, %s8
  %s11 = scalar_select 0, %s10, %s8
  $region1: #{tpu_custom_call.1} parent=0
    #allocation6 [shape = 'u8[8192]{0}', space=vmem, size = 0x2000, scoped, tag = 'input window, operand 0']
    #allocation7 [shape = 's32[2]{0}', space=sflag, size = 0x8, scoped, tag = 'scoped memory for tpu_custom_call.1']
    #allocation8 [shape = 'u8[16384]{0}', space=vmem, size = 0x4000, scoped, tag = 'input window, operand 1, single buffered']
    #allocation9 [shape = 's32[1]{0}', space=sflag, size = 0x4, scoped, tag = 'scoped memory for tpu_custom_call.1']
    #allocation10 [shape = 'u8[16384]{0}', space=vmem, size = 0x4000, scoped, tag = 'input window, operand 2, single buffered']
    #allocation11 [shape = 'u8[16384]{0}', space=vmem, size = 0x4000, scoped, tag = 'input window, operand 3, single buffered']
    #allocation12 [shape = 's32[1]{0}', space=sflag, size = 0x4, scoped, tag = 'scoped memory for tpu_custom_call.1']
    %12 = vsyncpa [#allocation7], 0
    %s13 = scalar_lea.sflag [#allocation7], 1
    %14 = vsyncpa %s13, 0
    %15 = vsyncpa [#allocation9], 0
    %16 = vsyncpa [#allocation12], 0
    loop: start=0, step=1, limit=4
    $region2: #{tpu_custom_call.1} parent=1 // loop_pre_header
      _
    $region3: #{tpu_custom_call.1} parent=1 // loop_header
      %s18 = sphi 0, %s22
      %p19 = scmp.ge.s32.totalorder %s18, 4
      %s25 = sphi 0, %s44
      %s26 = sphi 0, %s40
      %s27 = sphi 0, %s36
      %s28 = sphi 0, %s25
      %s29 = sphi 0, %s26
      %s30 = sphi 0, %s27
      %s31 = sphi 0, %s28
      %s32 = sphi 0, %s29
      %s33 = sphi 0, %s30
      %s47 = sphi 0, %s49
      %s50 = sphi 0, %s47
      %s51 = sphi 0, %s50
      %s67 = sphi 0, %s51
      %s71 = sphi 0, %s71
      %s73 = sphi 0, %s71
      %s74 = sphi 0, %s73
      %s88 = sphi 0, %s74
      %s92 = sphi 0, %s92
      %s94 = sphi 0, %s92
      %s95 = sphi 0, %s94
      %s109 = sphi 0, %s95
      %s113 = sphi 0, %s113
      %s115 = sphi 0, %s113
      %s116 = sphi 0, %s115
      %s130 = sphi 0, %s116
      %s134 = sphi 0, %s134
      %s136 = sphi 0, %s134
      %s137 = sphi 0, %s136
      %s151 = sphi 0, %s137
      %s155 = sphi 0, %s155
      %s157 = sphi 0, %s155
      %s158 = sphi 0, %s157
      %s172 = sphi 0, %s158
      %s176 = sphi 0, %s176
      %s178 = sphi 0, %s176
      %s179 = sphi 0, %s178
      %s193 = sphi 0, %s179
      %s201 = sphi 0, %s203
      %s204 = sphi 0, %s201
      %s205 = sphi 0, %s204
      %s221 = sphi 0, %s205
    $region4: #{tpu_custom_call.1} parent=1 // loop_header_branch
      %21 = sbr.rel (%p19) target = $region8
    $region5: #{tpu_custom_call.1} parent=1 // loop_body
      %s23 = ssub.s32 %s18, 1
      %s24 = ssub.s32 %s18, 2
      %s34 = sadd.s32 1, %s27
      %p35 = scmp.ge.s32.totalorder %s34, 1
      %s36 = scalar_select %p35, 0, %s34
      %s37 = sadd.s32 1, %s26
      %s38 = scalar_select %p35, %s37, %s26
      %p39 = scmp.ge.s32.totalorder %s38, 1
      %s40 = scalar_select %p39, 0, %s38
      %s41 = sadd.s32 1, %s25
      %s42 = scalar_select %p39, %s41, %s25
      %p43 = scmp.ge.s32.totalorder %s42, 2
      %s44 = scalar_select %p43, 0, %s42
      %s45 = ssub.s32 %s25, %s44
      %p46 = scmp.eq.s32.totalorder %s45, 0
      %s48 = sadd.s32 %s47, 1
      %s49 = scalar_select %p46, %s47, %s48
      %p52 = pneg %p46
      %p53 = scmp.eq.s32.totalorder %s18, 1
      %p54 = por %p52, %p53
      %p55 = scmp.ne.s32.totalorder %s47, %s50
      %p56 = scmp.eq.s32.totalorder %s18, 0
      %p57 = por %p55, %p56
      %p58 = scmp.ne.s32.totalorder %s47, %s50
      %p59 = scmp.eq.s32.totalorder %s23, 1
      %p60 = por %p58, %p59
      %p61 = scmp.ne.s32.totalorder %s50, %s51
      %p62 = scmp.eq.s32.totalorder %s23, 0
      %p63 = por %p61, %p62
      %p64 = scmp.ne.s32.totalorder %s50, %s51
      %p65 = scmp.eq.s32.totalorder %s24, 1
      %p66 = por %p64, %p65
      %p68 = scmp.ne.s32.totalorder %s51, %s67
      %p69 = scmp.eq.s32.totalorder %s24, 0
      %p70 = por %p68, %p69
      %s72 = sadd.s32 %s71, 1
      %p75 = scmp.eq.s32.totalorder %s18, 1
      %p76 = scmp.ne.s32.totalorder %s71, %s73
      %p77 = scmp.eq.s32.totalorder %s18, 0
      %p78 = por %p76, %p77
      %p79 = scmp.ne.s32.totalorder %s71, %s73
      %p80 = scmp.eq.s32.totalorder %s23, 1
      %p81 = por %p79, %p80
      %p82 = scmp.ne.s32.totalorder %s73, %s74
      %p83 = scmp.eq.s32.totalorder %s23, 0
      %p84 = por %p82, %p83
      %p85 = scmp.ne.s32.totalorder %s73, %s74
      %p86 = scmp.eq.s32.totalorder %s24, 1
      %p87 = por %p85, %p86
      %p89 = scmp.ne.s32.totalorder %s74, %s88
      %p90 = scmp.eq.s32.totalorder %s24, 0
      %p91 = por %p89, %p90
      %s93 = sadd.s32 %s92, 1
      %p96 = scmp.eq.s32.totalorder %s18, 1
      %p97 = scmp.ne.s32.totalorder %s92, %s94
      %p98 = scmp.eq.s32.totalorder %s18, 0
      %p99 = por %p97, %p98
      %p100 = scmp.ne.s32.totalorder %s92, %s94
      %p101 = scmp.eq.s32.totalorder %s23, 1
      %p102 = por %p100, %p101
      %p103 = scmp.ne.s32.totalorder %s94, %s95
      %p104 = scmp.eq.s32.totalorder %s23, 0
      %p105 = por %p103, %p104
      %p106 = scmp.ne.s32.totalorder %s94, %s95
      %p107 = scmp.eq.s32.totalorder %s24, 1
      %p108 = por %p106, %p107
      %p110 = scmp.ne.s32.totalorder %s95, %s109
      %p111 = scmp.eq.s32.totalorder %s24, 0
      %p112 = por %p110, %p111
      %s114 = sadd.s32 %s113, 1
      %p117 = scmp.eq.s32.totalorder %s18, 1
      %p118 = scmp.ne.s32.totalorder %s113, %s115
      %p119 = scmp.eq.s32.totalorder %s18, 0
      %p120 = por %p118, %p119
      %p121 = scmp.ne.s32.totalorder %s113, %s115
      %p122 = scmp.eq.s32.totalorder %s23, 1
      %p123 = por %p121, %p122
      %p124 = scmp.ne.s32.totalorder %s115, %s116
      %p125 = scmp.eq.s32.totalorder %s23, 0
      %p126 = por %p124, %p125
      %p127 = scmp.ne.s32.totalorder %s115, %s116
      %p128 = scmp.eq.s32.totalorder %s24, 1
      %p129 = por %p127, %p128
      %p131 = scmp.ne.s32.totalorder %s116, %s130
      %p132 = scmp.eq.s32.totalorder %s24, 0
      %p133 = por %p131, %p132
      %s135 = sadd.s32 %s134, 1
      %p138 = scmp.eq.s32.totalorder %s18, 1
      %p139 = scmp.ne.s32.totalorder %s134, %s136
      %p140 = scmp.eq.s32.totalorder %s18, 0
      %p141 = por %p139, %p140
      %p142 = scmp.ne.s32.totalorder %s134, %s136
      %p143 = scmp.eq.s32.totalorder %s23, 1
      %p144 = por %p142, %p143
      %p145 = scmp.ne.s32.totalorder %s136, %s137
      %p146 = scmp.eq.s32.totalorder %s23, 0
      %p147 = por %p145, %p146
      %p148 = scmp.ne.s32.totalorder %s136, %s137
      %p149 = scmp.eq.s32.totalorder %s24, 1
      %p150 = por %p148, %p149
      %p152 = scmp.ne.s32.totalorder %s137, %s151
      %p153 = scmp.eq.s32.totalorder %s24, 0
      %p154 = por %p152, %p153
      %s156 = sadd.s32 %s155, 1
      %p159 = scmp.eq.s32.totalorder %s18, 1
      %p160 = scmp.ne.s32.totalorder %s155, %s157
      %p161 = scmp.eq.s32.totalorder %s18, 0
      %p162 = por %p160, %p161
      %p163 = scmp.ne.s32.totalorder %s155, %s157
      %p164 = scmp.eq.s32.totalorder %s23, 1
      %p165 = por %p163, %p164
      %p166 = scmp.ne.s32.totalorder %s157, %s158
      %p167 = scmp.eq.s32.totalorder %s23, 0
      %p168 = por %p166, %p167
      %p169 = scmp.ne.s32.totalorder %s157, %s158
      %p170 = scmp.eq.s32.totalorder %s24, 1
      %p171 = por %p169, %p170
      %p173 = scmp.ne.s32.totalorder %s158, %s172
      %p174 = scmp.eq.s32.totalorder %s24, 0
      %p175 = por %p173, %p174
      %s177 = sadd.s32 %s176, 1
      %p180 = scmp.eq.s32.totalorder %s18, 1
      %p181 = scmp.ne.s32.totalorder %s176, %s178
      %p182 = scmp.eq.s32.totalorder %s18, 0
      %p183 = por %p181, %p182
      %p184 = scmp.ne.s32.totalorder %s176, %s178
      %p185 = scmp.eq.s32.totalorder %s23, 1
      %p186 = por %p184, %p185
      %p187 = scmp.ne.s32.totalorder %s178, %s179
      %p188 = scmp.eq.s32.totalorder %s23, 0
      %p189 = por %p187, %p188
      %p190 = scmp.ne.s32.totalorder %s178, %s179
      %p191 = scmp.eq.s32.totalorder %s24, 1
      %p192 = por %p190, %p191
      %p194 = scmp.ne.s32.totalorder %s179, %s193
      %p195 = scmp.eq.s32.totalorder %s24, 0
      %p196 = por %p194, %p195
      %s197 = ssub.s32 %s25, %s44
      %s198 = ssub.s32 %s26, %s40
      %s199 = sor.u32 %s197, %s198
      %p200 = scmp.eq.s32.totalorder %s199, 0
      %s202 = sadd.s32 %s201, 1
      %s203 = scalar_select %p200, %s201, %s202
      %p206 = pneg %p200
      %p207 = scmp.eq.s32.totalorder %s18, 1
      %p208 = por %p206, %p207
      %p209 = scmp.ne.s32.totalorder %s201, %s204
      %p210 = scmp.eq.s32.totalorder %s18, 0
      %p211 = por %p209, %p210
      %p212 = scmp.ne.s32.totalorder %s201, %s204
      %p213 = scmp.eq.s32.totalorder %s23, 1
      %p214 = por %p212, %p213
      %p215 = scmp.ne.s32.totalorder %s204, %s205
      %p216 = scmp.eq.s32.totalorder %s23, 0
      %p217 = por %p215, %p216
      %p218 = scmp.ne.s32.totalorder %s204, %s205
      %p219 = scmp.eq.s32.totalorder %s24, 1
      %p220 = por %p218, %p219
      %p222 = scmp.ne.s32.totalorder %s205, %s221
      %p223 = scmp.eq.s32.totalorder %s24, 0
      %p224 = por %p222, %p223
      %p225 = scmp.le.s32.totalorder 1, %s18
      %p226 = scmp.lt.s32.totalorder %s18, 3
      %p227 = pnand %p225, %p226
      %p228 = pneg %p227
      // Predicated region
      $region9: #{tpu_custom_call.1} parent=5 // pred_check
        _
      $region10: #{tpu_custom_call.1} parent=5 // pred_check_branch
        %230 = sbr.rel (%p227) target = $region12
      $region11: #{tpu_custom_call.1} parent=5 // pred_region
        %s231 = ssub.s32 %s18, 1
        // Predicated region
        $region13: #{tpu_custom_call.1} parent=11 // pred_check
          %p232 = pneg %p84
        $region14: #{tpu_custom_call.1} parent=11 // pred_check_branch
          %234 = sbr.rel (%p232) target = $region16
        $region15: #{tpu_custom_call.1} parent=11 // pred_region
          %s236 = ssub.s32 512, 512
          %237 = vsyncadd [#allocation9], %s236
          %s238 = sshll.u32 [#allocation8], 4
          %s239 = int_to_ptr.vmem [resolvable:$true] %s238
          %244 = dma.hbm_to_vmem [thread:$0]  %s1, 512, %s239, [#allocation9], 128, 128, 8
        $region16: #{tpu_custom_call.1} parent=11 // pred_fallthru
          _
        // Predicated region
        $region17: #{tpu_custom_call.1} parent=11 // pred_check
          %p245 = pneg %p105
        $region18: #{tpu_custom_call.1} parent=11 // pred_check_branch
          %247 = sbr.rel (%p245) target = $region20
        $region19: #{tpu_custom_call.1} parent=11 // pred_region
          %s249 = ssub.s32 512, 512
          %250 = vsyncadd [#allocation9], %s249
          %s251 = sshll.u32 [#allocation10], 4
          %s252 = int_to_ptr.vmem [resolvable:$true] %s251
          %257 = dma.hbm_to_vmem [thread:$0]  %s2, 512, %s252, [#allocation9], 128, 128, 8
        $region20: #{tpu_custom_call.1} parent=11 // pred_fallthru
          _
        // Predicated region
        $region21: #{tpu_custom_call.1} parent=11 // pred_check
          %p258 = pneg %p126
        $region22: #{tpu_custom_call.1} parent=11 // pred_check_branch
          %260 = sbr.rel (%p258) target = $region24
        $region23: #{tpu_custom_call.1} parent=11 // pred_region
          %s262 = ssub.s32 512, 512
          %263 = vsyncadd [#allocation12], %s262
          %s264 = sshll.u32 [#allocation11], 4
          %s265 = int_to_ptr.vmem [resolvable:$true] %s264
          %270 = dma.hbm_to_vmem [thread:$0]  %s3, 512, %s265, [#allocation12], 128, 128, 8
        $region24: #{tpu_custom_call.1} parent=11 // pred_fallthru
          _
        // Predicated region
        $region25: #{tpu_custom_call.1} parent=11 // pred_check
          %p271 = pneg %p147
        $region26: #{tpu_custom_call.1} parent=11 // pred_check_branch
          %273 = sbr.rel (%p271) target = $region28
        $region27: #{tpu_custom_call.1} parent=11 // pred_region
          _
        $region28: #{tpu_custom_call.1} parent=11 // pred_fallthru
          _
        // Predicated region
        $region29: #{tpu_custom_call.1} parent=11 // pred_check
          %p274 = pneg %p168
        $region30: #{tpu_custom_call.1} parent=11 // pred_check_branch
          %276 = sbr.rel (%p274) target = $region32
        $region31: #{tpu_custom_call.1} parent=11 // pred_region
          _
        $region32: #{tpu_custom_call.1} parent=11 // pred_fallthru
          _
        // Predicated region
        $region33: #{tpu_custom_call.1} parent=11 // pred_check
          %p277 = pneg %p189
        $region34: #{tpu_custom_call.1} parent=11 // pred_check_branch
          %279 = sbr.rel (%p277) target = $region36
        $region35: #{tpu_custom_call.1} parent=11 // pred_region
          _
        $region36: #{tpu_custom_call.1} parent=11 // pred_fallthru
          _
      $region12: #{tpu_custom_call.1} parent=5 // pred_fallthru
        _
      %p280 = scmp.lt.s32.totalorder %s18, 2
      // Predicated region
      $region37: #{tpu_custom_call.1} parent=5 // pred_check
        %p281 = pneg %p280
      $region38: #{tpu_custom_call.1} parent=5 // pred_check_branch
        %283 = sbr.rel (%p281) target = $region40
      $region39: #{tpu_custom_call.1} parent=5 // pred_region
        // Predicated region
        $region41: #{tpu_custom_call.1} parent=39 // pred_check
          %p284 = pneg %p57
        $region42: #{tpu_custom_call.1} parent=39 // pred_check_branch
          %286 = sbr.rel (%p284) target = $region44
        $region43: #{tpu_custom_call.1} parent=39 // pred_region
          %s287 = sand.u32 %s47, 1
          %s288 = scalar_lea.sflag [#allocation7], %s287
          %s289 = sand.u32 %s47, 1
          %s290 = smul.addr %s289, 8
          %s291 = scalar_lea.vmem [#allocation6], %s290
          %s293 = ssub.s32 128, 128
          %294 = vsyncadd %s288, %s293
          %s295 = smul.addr %s25, 128
          %s296 = scalar_lea.hbm %s0, %s295
          %s298 = sshll.u32 %s291, 4
          %s299 = int_to_ptr.vmem [resolvable:$true] %s298
          %301 = dma.hbm_to_vmem [thread:$0]  %s296, 128, %s299, %s288
        $region44: #{tpu_custom_call.1} parent=39 // pred_fallthru
          _
      $region40: #{tpu_custom_call.1} parent=5 // pred_fallthru
        _
      %p302 = scmp.le.s32.totalorder 1, %s18
      %p303 = scmp.lt.s32.totalorder %s18, 3
      %p304 = pnand %p302, %p303
      %p305 = pneg %p304
      // Predicated region
      $region45: #{tpu_custom_call.1} parent=5 // pred_check
        _
      $region46: #{tpu_custom_call.1} parent=5 // pred_check_branch
        %307 = sbr.rel (%p304) target = $region48
      $region47: #{tpu_custom_call.1} parent=5 // pred_region
        %s308 = ssub.s32 %s18, 1
        %s309 = sand.u32 %s50, 1
        %s310 = scalar_lea.sflag [#allocation7], %s309
        %s311 = sand.u32 %s50, 1
        %s312 = smul.addr %s311, 8
        %s313 = scalar_lea.vmem [#allocation6], %s312
        // Predicated region
        $region49: #{tpu_custom_call.1} parent=47 // pred_check
          %p314 = pneg %p63
        $region50: #{tpu_custom_call.1} parent=47 // pred_check_branch
          %316 = sbr.rel (%p314) target = $region52
        $region51: #{tpu_custom_call.1} parent=47 // pred_region
          %317 = dma.done %s310, 128
        $region52: #{tpu_custom_call.1} parent=47 // pred_fallthru
          _
        // Predicated region
        $region53: #{tpu_custom_call.1} parent=47 // pred_check
          %p318 = pneg %p84
        $region54: #{tpu_custom_call.1} parent=47 // pred_check_branch
          %320 = sbr.rel (%p318) target = $region56
        $region55: #{tpu_custom_call.1} parent=47 // pred_region
          %321 = dma.done [#allocation9], 512
        $region56: #{tpu_custom_call.1} parent=47 // pred_fallthru
          _
        // Predicated region
        $region57: #{tpu_custom_call.1} parent=47 // pred_check
          %p322 = pneg %p105
        $region58: #{tpu_custom_call.1} parent=47 // pred_check_branch
          %324 = sbr.rel (%p322) target = $region60
        $region59: #{tpu_custom_call.1} parent=47 // pred_region
          %325 = dma.done [#allocation9], 512
        $region60: #{tpu_custom_call.1} parent=47 // pred_fallthru
          _
        // Predicated region
        $region61: #{tpu_custom_call.1} parent=47 // pred_check
          %p326 = pneg %p126
        $region62: #{tpu_custom_call.1} parent=47 // pred_check_branch
          %328 = sbr.rel (%p326) target = $region64
        $region63: #{tpu_custom_call.1} parent=47 // pred_region
          %329 = dma.done [#allocation12], 512
        $region64: #{tpu_custom_call.1} parent=47 // pred_fallthru
          _
        %s330 = sand.u32 %s50, 1
        %s331 = scalar_lea.sflag [#allocation7], %s330
        %s332 = sand.u32 %s50, 1
        %s333 = smul.addr %s332, 8
        %s334 = scalar_lea.vmem [#allocation6], %s333
        %p335 = pneg %p63
        %p336 = pneg %p60
        %p337 = pneg %p84
        %p338 = pneg %p81
        %p339 = pneg %p105
        %p340 = pneg %p102
        %p341 = pneg %p126
        %p342 = pneg %p123
        %p343 = pneg %p147
        %p344 = pneg %p144
        %p345 = pneg %p168
        %p346 = pneg %p165
        %p347 = pneg %p189
        %p348 = pneg %p186
        %p349 = pneg %p217
        %p350 = pneg %p214
        %p351 = scmp.lt.s32.totalorder %s28, 1
        %s352 = scalar_select %p351, %s28, 1
        %p353 = scmp.lt.s32.totalorder %s29, 0
        %s354 = scalar_select %p353, %s29, 0
        %s355 = smul.addr %s352, 4
        %s356 = sadd.s32 %s354, %s355
        %s357 = smul.addr %s356, 8
        %s358 = scalar_lea.vmem %s7, %s357
        %p359 = scmp.lt.s32.totalorder %s28, 1
        %s360 = scalar_select %p359, %s28, 1
        %p361 = scmp.lt.s32.totalorder %s29, 0
        %s362 = scalar_select %p361, %s29, 0
        %s363 = smul.addr %s360, 4
        %s364 = sadd.s32 %s362, %s363
        %s365 = smul.addr %s364, 8
        %s366 = scalar_lea.vmem %s7, %s365
        %p367 = scmp.eq.s32.totalorder %s30, 0
        // Predicated region
        $region65: #{tpu_custom_call.1} parent=47 // pred_check
          %p368 = pneg %p367
        $region66: #{tpu_custom_call.1} parent=47 // pred_check_branch
          %370 = sbr.rel (%p368) target = $region68
        $region67: #{tpu_custom_call.1} parent=47 // pred_region
          %s371 = smul.u32 %s29, 8
          %s372 = scalar_lea.vmem %s313, %s371 [#allocation6]
          %v373 = vld [vmem:[%s372] sm:$0xff]
          %v374 = vld [vmem:[#allocation8] sm:$0xff]
          %v375 = vld [vmem:[#allocation8 + $0x8] sm:$0xff]
          %v376 = vld [vmem:[#allocation8 + $0x10] sm:$0xff]
          %v377 = vld [vmem:[#allocation8 + $0x18] sm:$0xff]
          %v378 = vld [vmem:[%s4] sm:$0x1]
          %v380 = vlaneseq
          %v381 = vshrl.u32 %v380, 7
          %v382 = vsub.s32 0, %v381
          %v383 = vrot.slane %v378, %v382
          %vm385 = vcmask 261120
          %v387 = vsel %vm385, %v373, 0
          %389 = vmatprep.subr.mxu0 0.0
          %390 = vmatpush1.msra.mxu0 0.0
          %391 = vmatprep.subr.mxu0 0.0
          %392 = vmatpush1.msra.mxu0 0.0
          %393 = vmatprep.subr.mxu0 0.0
          %394 = vmatpush1.msra.mxu0 0.0
          %395 = vmatprep.subr.mxu0 0.0
          %396 = vmatpush1.msra.mxu0 0.0
          %397 = vmatprep.subr.mxu0 0.0
          %398 = vmatpush1.msra.mxu0 0.0
          %399 = vmatprep.subr.mxu0 0.0
          %400 = vmatpush1.msra.mxu0 0.0
          %401 = vmatprep.subr.mxu0 0.0
          %402 = vmatpush1.msra.mxu0 0.0
          %403 = vmatprep.subr.mxu0 0.0
          %404 = vmatpush1.msra.mxu0 0.0
          %405 = vmatprep.subr.mxu0 0.0
          %406 = vmatpush1.msra.mxu0 0.0
          %407 = vmatprep.subr.mxu0 0.0
          %408 = vmatpush1.msra.mxu0 0.0
          %409 = vmatprep.subr.mxu0 0.0
          %410 = vmatpush1.msra.mxu0 0.0
          %411 = vmatprep.subr.mxu0 0.0
          %412 = vmatpush1.msra.mxu0 0.0
          %413 = vmatprep.subr.mxu0 0.0
          %414 = vmatpush1.msra.mxu0 %v377
          %415 = vmatprep.subr.mxu0 0.0
          %416 = vmatpush1.msra.mxu0 %v376
          %417 = vmatprep.subr.mxu0 0.0
          %418 = vmatpush1.msra.mxu0 %v375
          %419 = vmatprep.subr.mxu0 0.0
          %420 = vmatpush1.msra.mxu0 %v374
          %421 = vmatprep.subr.mxu0 0.0
          %422 = vmatpush2.msra.mxu0 0.0
          %423 = vmatprep.subr.mxu0 0.0
          %424 = vmatpush2.msra.mxu0 0.0
          %425 = vmatprep.subr.mxu0 0.0
          %426 = vmatpush2.msra.mxu0 0.0
          %427 = vmatprep.subr.mxu0 0.0
          %428 = vmatpush2.msra.mxu0 0.0
          %429 = vmatprep.subr.mxu0 0.0
          %430 = vmatpush2.msra.mxu0 0.0
          %431 = vmatprep.subr.mxu0 0.0
          %432 = vmatpush2.msra.mxu0 0.0
          %433 = vmatprep.subr.mxu0 0.0
          %434 = vmatpush2.msra.mxu0 0.0
          %435 = vmatprep.subr.mxu0 0.0
          %436 = vmatpush2.msra.mxu0 0.0
          %437 = vmatprep.subr.mxu0 0.0
          %438 = vmatpush2.msra.mxu0 0.0
          %439 = vmatprep.subr.mxu0 0.0
          %440 = vmatpush2.msra.mxu0 0.0
          %441 = vmatprep.subr.mxu0 0.0
          %442 = vmatpush2.msra.mxu0 0.0
          %443 = vmatprep.subr.mxu0 0.0
          %444 = vmatpush2.msra.mxu0 0.0
          %445 = vmatprep.subr.mxu0 0.0
          %446 = vmatpush2.msra.mxu0 0.0
          %447 = vmatprep.subr.mxu0 0.0
          %448 = vmatpush2.msra.mxu0 0.0
          %449 = vmatprep.subr.mxu0 0.0
          %450 = vmatpush2.msra.mxu0 0.0
          %451 = vmatprep.subr.mxu0 0.0
          %452 = vmatpush2.msra.mxu0 0.0
          %453 = vmatprep.mubr.f32.mxu0 0.0
          %454 = vmatmul.mubr.f32.gmra.mxu0 %v387
          %v455 = vpop.f32.mrf.mxu0
          %v456 = vadd.f32 %v383, %v455
          %v457 = vpop.f32.mrf.mxu0
          %458 = vdwg.mxu0
          %459 = vst.msk [vmem:[#allocation2] sm:$0xff] %vm385, %v456
          %vm460 = vcmask 7168
          %461 = vst.msk [vmem:[#allocation3] sm:$0xff] %vm460, -inf
          %462 = vst.msk [vmem:[#allocation4] sm:$0xff] %vm460, 0.0
          %463 = vst.msk [vmem:[#allocation5] sm:$0xff] %vm385, 0.0
        $region68: #{tpu_custom_call.1} parent=47 // pred_fallthru
          _
        %s464 = smul.u32 %s30, 8
        %s465 = smul.u32 %s29, 8
        %s466 = sadd.s32 %s465, 7
        %p467 = scmp.le.s32.totalorder %s464, %s466
        // Predicated region
        $region69: #{tpu_custom_call.1} parent=47 // pred_check
          %p468 = pneg %p467
        $region70: #{tpu_custom_call.1} parent=47 // pred_check_branch
          %470 = sbr.rel (%p468) target = $region72
        $region71: #{tpu_custom_call.1} parent=47 // pred_region
          %s471 = scalar_lea.vmem %s313, %s464 [#allocation6]
          %v472 = vld [vmem:[%s471] sm:$0xff]
          %v473 = vld [vmem:[#allocation10] sm:$0xff]
          %v474 = vld [vmem:[#allocation10 + $0x8] sm:$0xff]
          %v475 = vld [vmem:[#allocation10 + $0x10] sm:$0xff]
          %v476 = vld [vmem:[#allocation10 + $0x18] sm:$0xff]
          %v477 = vld [vmem:[%s5] sm:$0x1]
          %v479 = vlaneseq
          %v480 = vshrl.u32 %v479, 7
          %v481 = vsub.s32 0, %v480
          %v482 = vrot.slane %v477, %v481
          %vm484 = vcmask 261120
          %v486 = vsel %vm484, %v472, 0
          %488 = vmatprep.subr.mxu0 0.0
          %489 = vmatpush1.msra.mxu0 0.0
          %490 = vmatprep.subr.mxu0 0.0
          %491 = vmatpush1.msra.mxu0 0.0
          %492 = vmatprep.subr.mxu0 0.0
          %493 = vmatpush1.msra.mxu0 0.0
          %494 = vmatprep.subr.mxu0 0.0
          %495 = vmatpush1.msra.mxu0 0.0
          %496 = vmatprep.subr.mxu0 0.0
          %497 = vmatpush1.msra.mxu0 0.0
          %498 = vmatprep.subr.mxu0 0.0
          %499 = vmatpush1.msra.mxu0 0.0
          %500 = vmatprep.subr.mxu0 0.0
          %501 = vmatpush1.msra.mxu0 0.0
          %502 = vmatprep.subr.mxu0 0.0
          %503 = vmatpush1.msra.mxu0 0.0
          %504 = vmatprep.subr.mxu0 0.0
          %505 = vmatpush1.msra.mxu0 0.0
          %506 = vmatprep.subr.mxu0 0.0
          %507 = vmatpush1.msra.mxu0 0.0
          %508 = vmatprep.subr.mxu0 0.0
          %509 = vmatpush1.msra.mxu0 0.0
          %510 = vmatprep.subr.mxu0 0.0
          %511 = vmatpush1.msra.mxu0 0.0
          %512 = vmatprep.subr.mxu0 0.0
          %513 = vmatpush1.msra.mxu0 %v476
          %514 = vmatprep.subr.mxu0 0.0
          %515 = vmatpush1.msra.mxu0 %v475
          %516 = vmatprep.subr.mxu0 0.0
          %517 = vmatpush1.msra.mxu0 %v474
          %518 = vmatprep.subr.mxu0 0.0
          %519 = vmatpush1.msra.mxu0 %v473
          %520 = vmatprep.subr.mxu0 0.0
          %521 = vmatpush2.msra.mxu0 0.0
          %522 = vmatprep.subr.mxu0 0.0
          %523 = vmatpush2.msra.mxu0 0.0
          %524 = vmatprep.subr.mxu0 0.0
          %525 = vmatpush2.msra.mxu0 0.0
          %526 = vmatprep.subr.mxu0 0.0
          %527 = vmatpush2.msra.mxu0 0.0
          %528 = vmatprep.subr.mxu0 0.0
          %529 = vmatpush2.msra.mxu0 0.0
          %530 = vmatprep.subr.mxu0 0.0
          %531 = vmatpush2.msra.mxu0 0.0
          %532 = vmatprep.subr.mxu0 0.0
          %533 = vmatpush2.msra.mxu0 0.0
          %534 = vmatprep.subr.mxu0 0.0
          %535 = vmatpush2.msra.mxu0 0.0
          %536 = vmatprep.subr.mxu0 0.0
          %537 = vmatpush2.msra.mxu0 0.0
          %538 = vmatprep.subr.mxu0 0.0
          %539 = vmatpush2.msra.mxu0 0.0
          %540 = vmatprep.subr.mxu0 0.0
          %541 = vmatpush2.msra.mxu0 0.0
          %542 = vmatprep.subr.mxu0 0.0
          %543 = vmatpush2.msra.mxu0 0.0
          %544 = vmatprep.subr.mxu0 0.0
          %545 = vmatpush2.msra.mxu0 0.0
          %546 = vmatprep.subr.mxu0 0.0
          %547 = vmatpush2.msra.mxu0 0.0
          %548 = vmatprep.subr.mxu0 0.0
          %549 = vmatpush2.msra.mxu0 0.0
          %550 = vmatprep.subr.mxu0 0.0
          %551 = vmatpush2.msra.mxu0 0.0
          %552 = vmatprep.mubr.f32.mxu0 0.0
          %553 = vmatmul.mubr.f32.gmra.mxu0 %v486
          %v554 = vpop.f32.mrf.mxu0
          %v555 = vadd.f32 %v482, %v554
          %v556 = vpop.f32.mrf.mxu0
          %557 = vdwg.mxu0
          %v558 = vld [vmem:[#allocation11] sm:$0xff]
          %v559 = vld [vmem:[#allocation11 + $0x8] sm:$0xff]
          %v560 = vld [vmem:[#allocation11 + $0x10] sm:$0xff]
          %v561 = vld [vmem:[#allocation11 + $0x18] sm:$0xff]
          %v562 = vld [vmem:[%s6] sm:$0x1]
          %v564 = vlaneseq
          %v565 = vshrl.u32 %v564, 7
          %v566 = vsub.s32 0, %v565
          %v567 = vrot.slane %v562, %v566
          %569 = vmatprep.subr.mxu0 0.0
          %570 = vmatpush1.msra.mxu0 0.0
          %571 = vmatprep.subr.mxu0 0.0
          %572 = vmatpush1.msra.mxu0 0.0
          %573 = vmatprep.subr.mxu0 0.0
          %574 = vmatpush1.msra.mxu0 0.0
          %575 = vmatprep.subr.mxu0 0.0
          %576 = vmatpush1.msra.mxu0 0.0
          %577 = vmatprep.subr.mxu0 0.0
          %578 = vmatpush1.msra.mxu0 0.0
          %579 = vmatprep.subr.mxu0 0.0
          %580 = vmatpush1.msra.mxu0 0.0
          %581 = vmatprep.subr.mxu0 0.0
          %582 = vmatpush1.msra.mxu0 0.0
          %583 = vmatprep.subr.mxu0 0.0
          %584 = vmatpush1.msra.mxu0 0.0
          %585 = vmatprep.subr.mxu0 0.0
          %586 = vmatpush1.msra.mxu0 0.0
          %587 = vmatprep.subr.mxu0 0.0
          %588 = vmatpush1.msra.mxu0 0.0
          %589 = vmatprep.subr.mxu0 0.0
          %590 = vmatpush1.msra.mxu0 0.0
          %591 = vmatprep.subr.mxu0 0.0
          %592 = vmatpush1.msra.mxu0 0.0
          %593 = vmatprep.subr.mxu0 0.0
          %594 = vmatpush1.msra.mxu0 %v561
          %595 = vmatprep.subr.mxu0 0.0
          %596 = vmatpush1.msra.mxu0 %v560
          %597 = vmatprep.subr.mxu0 0.0
          %598 = vmatpush1.msra.mxu0 %v559
          %599 = vmatprep.subr.mxu0 0.0
          %600 = vmatpush1.msra.mxu0 %v558
          %601 = vmatprep.subr.mxu0 0.0
          %602 = vmatpush2.msra.mxu0 0.0
          %603 = vmatprep.subr.mxu0 0.0
          %604 = vmatpush2.msra.mxu0 0.0
          %605 = vmatprep.subr.mxu0 0.0
          %606 = vmatpush2.msra.mxu0 0.0
          %607 = vmatprep.subr.mxu0 0.0
          %608 = vmatpush2.msra.mxu0 0.0
          %609 = vmatprep.subr.mxu0 0.0
          %610 = vmatpush2.msra.mxu0 0.0
          %611 = vmatprep.subr.mxu0 0.0
          %612 = vmatpush2.msra.mxu0 0.0
          %613 = vmatprep.subr.mxu0 0.0
          %614 = vmatpush2.msra.mxu0 0.0
          %615 = vmatprep.subr.mxu0 0.0
          %616 = vmatpush2.msra.mxu0 0.0
          %617 = vmatprep.subr.mxu0 0.0
          %618 = vmatpush2.msra.mxu0 0.0
          %619 = vmatprep.subr.mxu0 0.0
          %620 = vmatpush2.msra.mxu0 0.0
          %621 = vmatprep.subr.mxu0 0.0
          %622 = vmatpush2.msra.mxu0 0.0
          %623 = vmatprep.subr.mxu0 0.0
          %624 = vmatpush2.msra.mxu0 0.0
          %625 = vmatprep.subr.mxu0 0.0
          %626 = vmatpush2.msra.mxu0 0.0
          %627 = vmatprep.subr.mxu0 0.0
          %628 = vmatpush2.msra.mxu0 0.0
          %629 = vmatprep.subr.mxu0 0.0
          %630 = vmatpush2.msra.mxu0 0.0
          %631 = vmatprep.subr.mxu0 0.0
          %632 = vmatpush2.msra.mxu0 0.0
          %633 = vmatprep.mubr.f32.mxu0 0.0
          %634 = vmatmul.mubr.f32.gmra.mxu0 %v486
          %v635 = vpop.f32.mrf.mxu0
          %v636 = vadd.f32 %v567, %v635
          %v637 = vpop.f32.mrf.mxu0
          %638 = vdwg.mxu0
          %v639 = vld [vmem:[#allocation2] sm:$0xff]
          %v641 = vsel %vm484, %v639, 0
          %v644 = vsel %vm484, %v555, 0
          %646 = vmatprep.subr.mxu0 0.0
          %647 = vmatpush1.xpose.msra.mxu0 0.0
          %648 = vmatprep.subr.mxu0 0.0
          %649 = vmatpush1.xpose.msra.mxu0 0.0
          %650 = vmatprep.subr.mxu0 0.0
          %651 = vmatpush1.xpose.msra.mxu0 0.0
          %652 = vmatprep.subr.mxu0 0.0
          %653 = vmatpush1.xpose.msra.mxu0 0.0
          %654 = vmatprep.subr.mxu0 0.0
          %655 = vmatpush1.xpose.msra.mxu0 0.0
          %656 = vmatprep.subr.mxu0 0.0
          %657 = vmatpush1.xpose.msra.mxu0 0.0
          %658 = vmatprep.subr.mxu0 0.0
          %659 = vmatpush1.xpose.msra.mxu0 0.0
          %660 = vmatprep.subr.mxu0 0.0
          %661 = vmatpush1.xpose.msra.mxu0 0.0
          %662 = vmatprep.subr.mxu0 0.0
          %663 = vmatpush1.xpose.msra.mxu0 0.0
          %664 = vmatprep.subr.mxu0 0.0
          %665 = vmatpush1.xpose.msra.mxu0 0.0
          %666 = vmatprep.subr.mxu0 0.0
          %667 = vmatpush1.xpose.msra.mxu0 0.0
          %668 = vmatprep.subr.mxu0 0.0
          %669 = vmatpush1.xpose.msra.mxu0 0.0
          %670 = vmatprep.subr.mxu0 0.0
          %671 = vmatpush1.xpose.msra.mxu0 0.0
          %672 = vmatprep.subr.mxu0 0.0
          %673 = vmatpush1.xpose.msra.mxu0 0.0
          %674 = vmatprep.subr.mxu0 0.0
          %675 = vmatpush1.xpose.msra.mxu0 0.0
          %676 = vmatprep.subr.mxu0 0.0
          %677 = vmatpush1.xpose.msra.mxu0 %v644
          %678 = vmatprep.subr.mxu0 0.0
          %679 = vmatpush2.xpose.msra.mxu0 0.0
          %680 = vmatprep.subr.mxu0 0.0
          %681 = vmatpush2.xpose.msra.mxu0 0.0
          %682 = vmatprep.subr.mxu0 0.0
          %683 = vmatpush2.xpose.msra.mxu0 0.0
          %684 = vmatprep.subr.mxu0 0.0
          %685 = vmatpush2.xpose.msra.mxu0 0.0
          %686 = vmatprep.subr.mxu0 0.0
          %687 = vmatpush2.xpose.msra.mxu0 0.0
          %688 = vmatprep.subr.mxu0 0.0
          %689 = vmatpush2.xpose.msra.mxu0 0.0
          %690 = vmatprep.subr.mxu0 0.0
          %691 = vmatpush2.xpose.msra.mxu0 0.0
          %692 = vmatprep.subr.mxu0 0.0
          %693 = vmatpush2.xpose.msra.mxu0 0.0
          %694 = vmatprep.subr.mxu0 0.0
          %695 = vmatpush2.xpose.msra.mxu0 0.0
          %696 = vmatprep.subr.mxu0 0.0
          %697 = vmatpush2.xpose.msra.mxu0 0.0
          %698 = vmatprep.subr.mxu0 0.0
          %699 = vmatpush2.xpose.msra.mxu0 0.0
          %700 = vmatprep.subr.mxu0 0.0
          %701 = vmatpush2.xpose.msra.mxu0 0.0
          %702 = vmatprep.subr.mxu0 0.0
          %703 = vmatpush2.xpose.msra.mxu0 0.0
          %704 = vmatprep.subr.mxu0 0.0
          %705 = vmatpush2.xpose.msra.mxu0 0.0
          %706 = vmatprep.subr.mxu0 0.0
          %707 = vmatpush2.xpose.msra.mxu0 0.0
          %708 = vmatprep.subr.mxu0 0.0
          %709 = vmatpush2.xpose.msra.mxu0 0.0
          %710 = vmatprep.mubr.f32.mxu0 0.0
          %711 = vmatmul.mubr.f32.gmra.mxu0 %v641
          %v712 = vpop.f32.mrf.mxu0
          %v713 = vadd.f32 0.0, %v712
          %v714 = vpop.f32.mrf.mxu0
          %715 = vdwg.mxu0
          %v716 = vlaneseq
          %v717 = vshrl.u32 %v716, 7
          %v718 = vstv %s465
          %v719 = vadd.s32 %v718, %v717
          %v720 = vlaneseq
          %v721 = vand.u32 %v720, 127
          %v722 = vstv %s464
          %v723 = vadd.s32 %v722, %v721
          %vm724 = vcmp.gt.s32.totalorder %v723, %v719
          %v725 = vsel %vm724, -inf, %v713
          %v726 = vld [vmem:[#allocation3] sm:$0xff]
          %vm727 = vcmask 64512
          %v728 = vsel %vm727, %v725, -inf
          %729 = vmax.xlane.f32.xlu0 %v728
          %v730 = vpop.xlane.xlu0 %729
          %v731 = vmax.f32 %v726, %v730
          %v732 = vsub.f32 %v726, %v731
          %v733 = vmul.f32 %v732, 1.442695
          %v734 = vpow.pop %v733
          %736 = vset.pattern.permute.xlu0 0
          %737 = vperm.xlu0 %736, %v731
          %v738 = vpop.permute.xlu0 %737
          %v740 = vsub.f32 %v725, %v738
          %v741 = vmul.f32 %v740, 1.442695
          %v742 = vpow.pop %v741
          %v743 = vld [vmem:[#allocation4] sm:$0xff]
          %v744 = vmul.f32 %v734, %v743
          %v745 = vsel %vm727, %v742, 0.0
          %746 = vadd.xlane.f32.xlu0 %v745
          %v747 = vpop.xlane.xlu0 %746
          %v748 = vadd.f32 %v744, %v747
          %vm749 = vcmask 7168
          %750 = vst.msk [vmem:[#allocation4] sm:$0xff] %vm749, %v748
          %v751 = vld [vmem:[#allocation5] sm:$0xff]
          %753 = vset.pattern.permute.xlu0 0
          %754 = vperm.xlu0 %753, %v734
          %v755 = vpop.permute.xlu0 %754
          %v757 = vmul.f32 %v755, %v751
          %v759 = vsel %vm727, %v742, 0
          %761 = vmatprep.subr.mxu0 0.0
          %762 = vmatpush1.msra.mxu0 0.0
          %763 = vmatprep.subr.mxu0 0.0
          %764 = vmatpush1.msra.mxu0 0.0
          %765 = vmatprep.subr.mxu0 0.0
          %766 = vmatpush1.msra.mxu0 0.0
          %767 = vmatprep.subr.mxu0 0.0
          %768 = vmatpush1.msra.mxu0 0.0
          %769 = vmatprep.subr.mxu0 0.0
          %770 = vmatpush1.msra.mxu0 0.0
          %771 = vmatprep.subr.mxu0 0.0
          %772 = vmatpush1.msra.mxu0 0.0
          %773 = vmatprep.subr.mxu0 0.0
          %774 = vmatpush1.msra.mxu0 0.0
          %775 = vmatprep.subr.mxu0 0.0
          %776 = vmatpush1.msra.mxu0 0.0
          %777 = vmatprep.subr.mxu0 0.0
          %778 = vmatpush1.msra.mxu0 0.0
          %779 = vmatprep.subr.mxu0 0.0
          %780 = vmatpush1.msra.mxu0 0.0
          %781 = vmatprep.subr.mxu0 0.0
          %782 = vmatpush1.msra.mxu0 0.0
          %783 = vmatprep.subr.mxu0 0.0
          %784 = vmatpush1.msra.mxu0 0.0
          %785 = vmatprep.subr.mxu0 0.0
          %786 = vmatpush1.msra.mxu0 0.0
          %787 = vmatprep.subr.mxu0 0.0
          %788 = vmatpush1.msra.mxu0 0.0
          %789 = vmatprep.subr.mxu0 0.0
          %790 = vmatpush1.msra.mxu0 0.0
          %791 = vmatprep.subr.mxu0 0.0
          %792 = vmatpush1.msra.mxu0 %v636
          %793 = vmatprep.subr.mxu0 0.0
          %794 = vmatpush2.msra.mxu0 0.0
          %795 = vmatprep.subr.mxu0 0.0
          %796 = vmatpush2.msra.mxu0 0.0
          %797 = vmatprep.subr.mxu0 0.0
          %798 = vmatpush2.msra.mxu0 0.0
          %799 = vmatprep.subr.mxu0 0.0
          %800 = vmatpush2.msra.mxu0 0.0
          %801 = vmatprep.subr.mxu0 0.0
          %802 = vmatpush2.msra.mxu0 0.0
          %803 = vmatprep.subr.mxu0 0.0
          %804 = vmatpush2.msra.mxu0 0.0
          %805 = vmatprep.subr.mxu0 0.0
          %806 = vmatpush2.msra.mxu0 0.0
          %807 = vmatprep.subr.mxu0 0.0
          %808 = vmatpush2.msra.mxu0 0.0
          %809 = vmatprep.subr.mxu0 0.0
          %810 = vmatpush2.msra.mxu0 0.0
          %811 = vmatprep.subr.mxu0 0.0
          %812 = vmatpush2.msra.mxu0 0.0
          %813 = vmatprep.subr.mxu0 0.0
          %814 = vmatpush2.msra.mxu0 0.0
          %815 = vmatprep.subr.mxu0 0.0
          %816 = vmatpush2.msra.mxu0 0.0
          %817 = vmatprep.subr.mxu0 0.0
          %818 = vmatpush2.msra.mxu0 0.0
          %819 = vmatprep.subr.mxu0 0.0
          %820 = vmatpush2.msra.mxu0 0.0
          %821 = vmatprep.subr.mxu0 0.0
          %822 = vmatpush2.msra.mxu0 0.0
          %823 = vmatprep.subr.mxu0 0.0
          %824 = vmatpush2.msra.mxu0 0.0
          %825 = vmatprep.mubr.f32.mxu0 0.0
          %826 = vmatmul.mubr.f32.gmra.mxu0 %v759
          %v827 = vpop.f32.mrf.mxu0
          %v828 = vadd.f32 0.0, %v827
          %v829 = vpop.f32.mrf.mxu0
          %830 = vdwg.mxu0
          %v831 = vadd.f32 %v757, %v828
          %832 = vst.msk [vmem:[#allocation5] sm:$0xff] %vm484, %v831
          %833 = vst.msk [vmem:[#allocation3] sm:$0xff] %vm749, %v731
        $region72: #{tpu_custom_call.1} parent=47 // pred_fallthru
          _
        // Predicated region
        $region73: #{tpu_custom_call.1} parent=47 // pred_check
          %p834 = pneg %p367
        $region74: #{tpu_custom_call.1} parent=47 // pred_check_branch
          %836 = sbr.rel (%p834) target = $region76
        $region75: #{tpu_custom_call.1} parent=47 // pred_region
          %v837 = vld [vmem:[#allocation5] sm:$0xff]
          %v838 = vld [vmem:[#allocation4] sm:$0xff]
          %v839 = vrcp.pop %v838
          %v840 = vmul.f32 1.0, %v839
          %842 = vset.pattern.permute.xlu0 0
          %843 = vperm.xlu0 %842, %v840
          %v844 = vpop.permute.xlu0 %843
          %v846 = vmul.f32 %v837, %v844
          %v847 = vlaneseq
          %v848 = vshrl.u32 %v847, 7
          %v849 = vadd.s32 %v848, 8
          %v850 = vadd.s32 %v848, 16
          %v851 = vadd.s32 %v848, 24
          %v852 = vlaneseq
          %v853 = vand.u32 %v852, 127
          %vm854 = vcmp.eq.s32.totalorder %v848, %v853
          %vm855 = vcmp.eq.s32.totalorder %v849, %v853
          %vm856 = vcmp.eq.s32.totalorder %v850, %v853
          %vm857 = vcmp.eq.s32.totalorder %v851, %v853
          %v858 = vsel %vm854, 1, 0
          %v859 = vsel %vm855, 1, 0
          %v860 = vsel %vm856, 1, 0
          %v861 = vsel %vm857, 1, 0
          %v862 = vcvt.s32.f32 %v858
          %v863 = vcvt.s32.f32 %v859
          %v864 = vcvt.s32.f32 %v860
          %v865 = vcvt.s32.f32 %v861
          %vm866 = vcmask 261120
          %v868 = vsel %vm866, %v862, 0
          %v871 = vsel %vm866, %v863, 0
          %v874 = vsel %vm866, %v864, 0
          %v877 = vsel %vm866, %v865, 0
          %v880 = vsel %vm866, %v846, 0
          %882 = vmatprep.subr.mxu0 0.0
          %883 = vmatpush1.xpose.msra.mxu0 0.0
          %884 = vmatprep.subr.mxu0 0.0
          %885 = vmatpush1.xpose.msra.mxu0 0.0
          %886 = vmatprep.subr.mxu0 0.0
          %887 = vmatpush1.xpose.msra.mxu0 0.0
          %888 = vmatprep.subr.mxu0 0.0
          %889 = vmatpush1.xpose.msra.mxu0 0.0
          %890 = vmatprep.subr.mxu0 0.0
          %891 = vmatpush1.xpose.msra.mxu0 0.0
          %892 = vmatprep.subr.mxu0 0.0
          %893 = vmatpush1.xpose.msra.mxu0 0.0
          %894 = vmatprep.subr.mxu0 0.0
          %895 = vmatpush1.xpose.msra.mxu0 0.0
          %896 = vmatprep.subr.mxu0 0.0
          %897 = vmatpush1.xpose.msra.mxu0 0.0
          %898 = vmatprep.subr.mxu0 0.0
          %899 = vmatpush1.xpose.msra.mxu0 0.0
          %900 = vmatprep.subr.mxu0 0.0
          %901 = vmatpush1.xpose.msra.mxu0 0.0
          %902 = vmatprep.subr.mxu0 0.0
          %903 = vmatpush1.xpose.msra.mxu0 0.0
          %904 = vmatprep.subr.mxu0 0.0
          %905 = vmatpush1.xpose.msra.mxu0 0.0
          %906 = vmatprep.subr.mxu0 0.0
          %907 = vmatpush1.xpose.msra.mxu0 0.0
          %908 = vmatprep.subr.mxu0 0.0
          %909 = vmatpush1.xpose.msra.mxu0 0.0
          %910 = vmatprep.subr.mxu0 0.0
          %911 = vmatpush1.xpose.msra.mxu0 0.0
          %912 = vmatprep.subr.mxu0 0.0
          %913 = vmatpush1.xpose.msra.mxu0 %v880
          %914 = vmatprep.subr.mxu0 0.0
          %915 = vmatpush2.xpose.msra.mxu0 0.0
          %916 = vmatprep.subr.mxu0 0.0
          %917 = vmatpush2.xpose.msra.mxu0 0.0
          %918 = vmatprep.subr.mxu0 0.0
          %919 = vmatpush2.xpose.msra.mxu0 0.0
          %920 = vmatprep.subr.mxu0 0.0
          %921 = vmatpush2.xpose.msra.mxu0 0.0
          %922 = vmatprep.subr.mxu0 0.0
          %923 = vmatpush2.xpose.msra.mxu0 0.0
          %924 = vmatprep.subr.mxu0 0.0
          %925 = vmatpush2.xpose.msra.mxu0 0.0
          %926 = vmatprep.subr.mxu0 0.0
          %927 = vmatpush2.xpose.msra.mxu0 0.0
          %928 = vmatprep.subr.mxu0 0.0
          %929 = vmatpush2.xpose.msra.mxu0 0.0
          %930 = vmatprep.subr.mxu0 0.0
          %931 = vmatpush2.xpose.msra.mxu0 0.0
          %932 = vmatprep.subr.mxu0 0.0
          %933 = vmatpush2.xpose.msra.mxu0 0.0
          %934 = vmatprep.subr.mxu0 0.0
          %935 = vmatpush2.xpose.msra.mxu0 0.0
          %936 = vmatprep.subr.mxu0 0.0
          %937 = vmatpush2.xpose.msra.mxu0 0.0
          %938 = vmatprep.subr.mxu0 0.0
          %939 = vmatpush2.xpose.msra.mxu0 0.0
          %940 = vmatprep.subr.mxu0 0.0
          %941 = vmatpush2.xpose.msra.mxu0 0.0
          %942 = vmatprep.subr.mxu0 0.0
          %943 = vmatpush2.xpose.msra.mxu0 0.0
          %944 = vmatprep.subr.mxu0 0.0
          %945 = vmatpush2.xpose.msra.mxu0 0.0
          %946 = vmatprep.mubr.f32.mxu0 0.0
          %947 = vmatmul.mubr.f32.gmra.mxu0 %v868
          %v948 = vpop.f32.mrf.mxu0
          %v949 = vadd.f32 0.0, %v948
          %v950 = vpop.f32.mrf.mxu0
          %951 = vmatprep.mubr.f32.mxu0 0.0
          %952 = vmatmul.mubr.f32.gmra.mxu0 %v871
          %v953 = vpop.f32.mrf.mxu0
          %v954 = vadd.f32 0.0, %v953
          %v955 = vpop.f32.mrf.mxu0
          %956 = vmatprep.mubr.f32.mxu0 0.0
          %957 = vmatmul.mubr.f32.gmra.mxu0 %v874
          %v958 = vpop.f32.mrf.mxu0
          %v959 = vadd.f32 0.0, %v958
          %v960 = vpop.f32.mrf.mxu0
          %961 = vmatprep.mubr.f32.mxu0 0.0
          %962 = vmatmul.mubr.f32.gmra.mxu0 %v877
          %v963 = vpop.f32.mrf.mxu0
          %v964 = vadd.f32 0.0, %v963
          %v965 = vpop.f32.mrf.mxu0
          %966 = vdwg.mxu0
          %vm967 = vcmask 64512
          %968 = vst.msk [vmem:[%s366] sm:$0xff] %vm967, %v949
          %969 = vst.msk [vmem:[%s366 + $0x8] sm:$0xff] %vm967, %v954
          %970 = vst.msk [vmem:[%s366 + $0x10] sm:$0xff] %vm967, %v959
          %971 = vst.msk [vmem:[%s366 + $0x18] sm:$0xff] %vm967, %v964
        $region76: #{tpu_custom_call.1} parent=47 // pred_fallthru
          _
        %p972 = scmp.lt.s32.totalorder %s28, 1
        %s973 = scalar_select %p972, %s28, 1
        %p974 = scmp.lt.s32.totalorder %s29, 0
        %s975 = scalar_select %p974, %s29, 0
        %s976 = smul.addr %s973, 4
        %s977 = sadd.s32 %s975, %s976
        %s978 = smul.addr %s977, 8
        %s979 = scalar_lea.vmem %s7, %s978
        // Predicated region
        $region77: #{tpu_custom_call.1} parent=47 // pred_check
          %p980 = pneg %p214
        $region78: #{tpu_custom_call.1} parent=47 // pred_check_branch
          %982 = sbr.rel (%p980) target = $region80
        $region79: #{tpu_custom_call.1} parent=47 // pred_region
          _
        $region80: #{tpu_custom_call.1} parent=47 // pred_fallthru
          _
      $region48: #{tpu_custom_call.1} parent=5 // pred_fallthru
        _
      %p983 = scmp.le.s32.totalorder 2, %s18
      // Predicated region
      $region81: #{tpu_custom_call.1} parent=5 // pred_check
        %p984 = pneg %p983
      $region82: #{tpu_custom_call.1} parent=5 // pred_check_branch
        %986 = sbr.rel (%p984) target = $region84
      $region83: #{tpu_custom_call.1} parent=5 // pred_region
        %s987 = ssub.s32 %s18, 2
        // Predicated region
        $region85: #{tpu_custom_call.1} parent=83 // pred_check
          %p988 = pneg %p220
        $region86: #{tpu_custom_call.1} parent=83 // pred_check_branch
          %990 = sbr.rel (%p988) target = $region88
        $region87: #{tpu_custom_call.1} parent=83 // pred_region
          %p991 = scmp.lt.s32.totalorder %s31, 1
          %s992 = scalar_select %p991, %s31, 1
          %p993 = scmp.lt.s32.totalorder %s32, 0
          %s994 = scalar_select %p993, %s32, 0
          %s995 = smul.addr %s992, 4
          %s996 = sadd.s32 %s994, %s995
          %s997 = smul.addr %s996, 8
          %s998 = scalar_lea.vmem %s7, %s997
        $region88: #{tpu_custom_call.1} parent=83 // pred_fallthru
          _
      $region84: #{tpu_custom_call.1} parent=5 // pred_fallthru
        _
    $region6: #{tpu_custom_call.1} parent=1 // loop_footer
      %s22 = sadd.s32 1, %s18
    $region7: #{tpu_custom_call.1} parent=1 // loop_footer_branch
      %17 = sbr.rel target = $region3
    $region8: #{tpu_custom_call.1} parent=1 // loop_exit
      _
    %999 = vsyncpa [#allocation7], 1
    %s1000 = scalar_lea.sflag [#allocation7], 1
    %1001 = vsyncpa %s1000, 1
    %1002 = vsyncpa [#allocation9], 1
    %1003 = vsyncpa [#allocation12], 1

</llo_original>
